<compile_context>
chip_gen: v5e
topology: v5e:2x2
jax: 0.10.0
libtpu: 0.0.40
codegen_flags: <defaults>
</compile_context>

<pallas_src>
import functools

import jax
import jax.numpy as jnp
from jax.experimental import pallas as pl
from jax.experimental.pallas import tpu as pltpu

_LANES = 128
_SUBLANES = 8


def _elem_pow(x, p):
    """x**p for x >= 0, p > 0, with 0**p == 0 guaranteed (mask/garbage-safe)."""
    if float(p) == 2.0:
        return x * x
    if float(p).is_integer():
        k = int(p)
        r = x
        for _ in range(k - 1):          # unrolled multiplies; stays on the VPU
            r = r * x
        return r
    # General float exponent: exp(p*log(x)); guard exact zeros so masked/padded
    # elements contribute nothing.  (Assumes non-negative inputs, as for dice;
    # negative inputs would differ from torch.pow which returns NaN there.)
    safe = jnp.where(x > 0, x, 1.0)
    return jnp.where(x > 0, jnp.exp(jnp.float32(p) * jnp.log(safe)), 0.0)


def _dice_kernel(p_ref, t_ref, num_ref, den_ref, *, p, d_total, tile_d,
                 ragged_d, binary_target):
    j = pl.program_id(1)

    @pl.when(j == 0)
    def _():
        num_ref[...] = jnp.zeros_like(num_ref)
        den_ref[...] = jnp.zeros_like(den_ref)

    def accum(mask_tail):
        pr = p_ref[...].astype(jnp.float32)   # (bn, tile_d)
        tg = t_ref[...].astype(jnp.float32)
        if mask_tail:
            # Last D-chunk: lanes >= d_total are out-of-bounds garbage (Pallas
            # does not zero-fill edge blocks) -> mask BOTH operands before any
            # arithmetic.  Only emitted for the final chunk.
            col = jax.lax.broadcasted_iota(jnp.int32, pr.shape, 1) + j * tile_d
            valid = col < d_total
            pr = jnp.where(valid, pr, 0.0)
            tg = jnp.where(valid, tg, 0.0)
        # Per-step per-row reduction straight into the resident output blocks.
        num_ref[...] += jnp.sum(pr * tg, axis=1, keepdims=True)
        tg_pow = tg if binary_target else _elem_pow(tg, p)
        den_ref[...] += jnp.sum(_elem_pow(pr, p) + tg_pow, axis=1, keepdims=True)

    if ragged_d:
        last_j = pl.num_programs(1) - 1

        @pl.when(j != last_j)
        def _():
            accum(False)          # dense hot path: pure mul/add

        @pl.when(j == last_j)
        def _():
            accum(True)           # masked tail path, last chunk only
    else:
        accum(False)


def _dice_sums(predict_2d, target_2d, p, binary_target=False,
               target_block_bytes=4 * 1024 * 1024, max_tile_d=None):
    """predict_2d, target_2d: [N, D]. Returns (num[N], den[N]) in float32."""
    N, D = predict_2d.shape
    itemsize = max(predict_2d.dtype.itemsize, target_2d.dtype.itemsize)
    # Sublane packing of the physical VMEM tile (f32->8, bf16->16, int8->32).
    sub = max(_SUBLANES, 32 // itemsize)
    target_elems = max(1, int(target_block_bytes) // itemsize)

    # ---- choose rows per block (bn) --------------------------------------
    if N <= _SUBLANES:
        bn = N                                    # block dim == full dim: legal
    else:
        rows = (target_elems // max(D, 1)) // _SUBLANES * _SUBLANES
        bn = max(_SUBLANES, min(rows, (N // _SUBLANES) * _SUBLANES))
    bn_phys = -(-bn // sub) * sub                 # sublane-padded rows in VMEM

    # ---- choose lanes per block (tile_d) ----------------------------------
    d_budget = max(_LANES, (target_elems // bn_phys) // _LANES * _LANES)
    if max_tile_d is not None:                    # mainly for tests / tuning
        d_budget = min(d_budget, max(_LANES, (int(max_tile_d) // _LANES) * _LANES))
    if d_budget >= D:
        tile_d = D                                # single chunk, no lane mask
        num_chunks = 1
    else:
        tile_d = d_budget
        num_chunks = pl.cdiv(D, tile_d)
    ragged_d = (D % tile_d) != 0

    kernel = functools.partial(
        _dice_kernel, p=p, d_total=D, tile_d=tile_d,
        ragged_d=ragged_d, binary_target=binary_target)

    num, den = pl.pallas_call(
        kernel,
        out_shape=(
            jax.ShapeDtypeStruct((N, 1), jnp.float32),
            jax.ShapeDtypeStruct((N, 1), jnp.float32),
        ),
        grid_spec=pltpu.PrefetchScalarGridSpec(
            num_scalar_prefetch=0,
            grid=(pl.cdiv(N, bn), num_chunks),
            in_specs=[
                pl.BlockSpec((bn, tile_d), lambda n, j: (n, j)),
                pl.BlockSpec((bn, tile_d), lambda n, j: (n, j)),
            ],
            out_specs=[
                pl.BlockSpec((bn, 1), lambda n, j: (n, 0)),
                pl.BlockSpec((bn, 1), lambda n, j: (n, 0)),
            ],
        ),
        compiler_params=pltpu.CompilerParams(
            # batch-block axis parallel, D-chunk reduction axis arbitrary.
            dimension_semantics=("parallel", "arbitrary"),
            # ~16 MiB of double-buffered inputs by construction; 32 MiB limit
            # leaves headroom and is safe on v7x's 64 MiB physical VMEM.
            vmem_limit_bytes=32 * 1024 * 1024,
        ),
    )(predict_2d, target_2d)
    return num[:, 0], den[:, 0]


def binary_dice_loss(predict, target, smooth=1.0, p=2, reduction="mean",
                     assume_binary_target=False,
                     target_block_bytes=4 * 1024 * 1024, max_tile_d=None):
    """JAX/Pallas equivalent of BinaryDiceLoss.forward.

    predict, target: same shape [N, *] (e.g. NCHW). Any float dtype (bf16
    inputs are read as-is and accumulated in f32 inside the kernel).
    """
    assert predict.shape[0] == target.shape[0], "predict & target batch size don't match"
    assert float(p) > 0, "p must be > 0 (tail masking assumes 0**p == 0)"
    N = predict.shape[0]
    predict_2d = predict.reshape(N, -1)   # layout-preserving, free
    target_2d = target.reshape(N, -1)

    num, den = _dice_sums(predict_2d, target_2d, p=p,
                          binary_target=assume_binary_target,
                          target_block_bytes=target_block_bytes,
                          max_tile_d=max_tile_d)
    num = num + jnp.float32(smooth)
    den = den + jnp.float32(smooth)
    loss = 1.0 - num / den  # shape [N], float32

    if reduction == "mean":
        return jnp.mean(loss)
    elif reduction == "sum":
        return jnp.sum(loss)
    elif reduction == "none":
        return loss
    else:
        raise Exception("Unexpected reduction {}".format(reduction))


def _ref_loss(predict, target, smooth=1.0, p=2, reduction="mean"):
    """Pure-JAX reference of the PyTorch module."""
    N = predict.shape[0]
    p2 = predict.reshape(N, -1).astype(jnp.float32)
    t2 = target.reshape(N, -1).astype(jnp.float32)
    num = jnp.sum(p2 * t2, axis=1) + smooth
    den = jnp.sum(p2 ** p + t2 ** p, axis=1) + smooth
    loss = 1.0 - num / den
    if reduction == "mean":
        return jnp.mean(loss)
    if reduction == "sum":
        return jnp.sum(loss)
    return loss


if __name__ == "__main__":
    key = jax.random.PRNGKey(0)
    k1, k2, k3, k4, k5, k6, k7, k8 = jax.random.split(key, 8)

    # Case 1: NCHW [2, 4, 16, 16] -> D = 1024 (single chunk, bn = N = 2).
    N, C, H, W = 2, 4, 16, 16
    predict1 = jax.nn.sigmoid(jax.random.normal(k1, (N, C, H, W), dtype=jnp.float32))
    target1 = (jax.random.uniform(k2, (N, C, H, W)) > 0.5).astype(jnp.float32)

    loss_mean = binary_dice_loss(predict1, target1, smooth=1.0, p=2, reduction="mean")
    loss_none = binary_dice_loss(predict1, target1, smooth=1.0, p=2, reduction="none")
    jax.block_until_ready(loss_mean)
    jax.block_until_ready(loss_none)
    assert jnp.allclose(loss_none, _ref_loss(predict1, target1, reduction="none"),
                        rtol=1e-5, atol=1e-5)
    assert jnp.allclose(loss_mean, _ref_loss(predict1, target1, reduction="mean"),
                        rtol=1e-5, atol=1e-5)
    # Binary-target fast path gives identical results for 0/1 targets.
    loss_bin = binary_dice_loss(predict1, target1, reduction="none",
                                assume_binary_target=True)
    jax.block_until_ready(loss_bin)
    assert jnp.allclose(loss_bin, loss_none, rtol=1e-6, atol=1e-6)

    # Case 2: D = 300 (not a multiple of 128) with integer p = 3 ->
    # full-dim lane block, no padding, no mask.
    predict2 = jax.nn.sigmoid(jax.random.normal(k3, (3, 3, 10, 10), dtype=jnp.float32))
    target2 = (jax.random.uniform(k4, (3, 3, 10, 10)) > 0.5).astype(jnp.float32)
    l2 = binary_dice_loss(predict2, target2, smooth=1.0, p=3, reduction="sum")
    jax.block_until_ready(l2)
    assert jnp.allclose(l2, _ref_loss(predict2, target2, p=3, reduction="sum"),
                        rtol=1e-5, atol=1e-5)

    # Case 3: ragged D chunking (D = 1152, tile_d forced to 512) -> exercises
    # the gated in-kernel lane-tail mask on the last chunk.
    predict3 = jax.nn.sigmoid(jax.random.normal(k5, (2, 1152), dtype=jnp.float32))
    target3 = (jax.random.uniform(k6, (2, 1152)) > 0.5).astype(jnp.float32)
    l3 = binary_dice_loss(predict3, target3, smooth=1.0, p=2, reduction="none",
                          max_tile_d=512)
    jax.block_until_ready(l3)
    assert jnp.allclose(l3, _ref_loss(predict3, target3, reduction="none"),
                        rtol=1e-5, atol=1e-5)

    # Case 4: N = 12 (not a multiple of the 8-row batch block) -> exercises the
    # ragged batch edge block (OOB rows accumulate into dropped output rows).
    predict4 = jax.nn.sigmoid(jax.random.normal(k7, (12, 2, 16, 8), dtype=jnp.float32))
    target4 = (jax.random.uniform(k8, (12, 2, 16, 8)) > 0.5).astype(jnp.float32)
    l4 = binary_dice_loss(predict4, target4, smooth=1.0, p=2, reduction="none")
    jax.block_until_ready(l4)
    assert jnp.allclose(l4, _ref_loss(predict4, target4, reduction="none"),
                        rtol=1e-5, atol=1e-5)

    print("KERNEL_OK")
</pallas_src>

<mosaic_0001>
module attributes {stable_mosaic.version = 11 : i64} {
  func.func @_dice_kernel(%arg0: i32, %arg1: i32, %arg2: memref<2x1024xf32, #tpu.memory_space<vmem>>, %arg3: memref<2x1024xf32, #tpu.memory_space<vmem>>, %arg4: memref<2x1xf32, #tpu.memory_space<vmem>>, %arg5: memref<2x1xf32, #tpu.memory_space<vmem>>) attributes {dimension_semantics = [#tpu.dimension_semantics<parallel>, #tpu.dimension_semantics<arbitrary>], iteration_bounds = array<i64: 1, 1>, scalar_prefetch = 0 : i64, scratch_operands = 0 : i64, tpu.core_type = #tpu.core_type<tc>, window_params = [{transform_indices = @transform_0, window_bounds = array<i64: 2, 1024>}, {transform_indices = @transform_1, window_bounds = array<i64: 2, 1024>}, {transform_indices = @transform_2, window_bounds = array<i64: 2, 1>}, {transform_indices = @transform_3, window_bounds = array<i64: 2, 1>}]} {
    %c0_i32 = arith.constant 0 : i32
    %0 = arith.cmpi eq, %arg1, %c0_i32 : i32
    %1 = arith.extui %0 : i1 to i32
    %c0_i32_0 = arith.constant 0 : i32
    %2 = arith.cmpi ne, %1, %c0_i32_0 : i32
    scf.if %2 {
      %cst_13 = arith.constant 0.000000e+00 : f32
      %19 = vector.broadcast %cst_13 : f32 to vector<2x1xf32>
      %c0_14 = arith.constant 0 : index
      %c0_15 = arith.constant 0 : index
      %20 = vector.load %arg4[%c0_14, %c0_15] : memref<2x1xf32, #tpu.memory_space<vmem>>, vector<2x1xf32>
      tpu.vector_store %arg4[%c0_14, %c0_15], %19 {strides = array<i32>} : memref<2x1xf32, #tpu.memory_space<vmem>>, vector<2x1xf32>,
      %cst_16 = arith.constant 0.000000e+00 : f32
      %21 = vector.broadcast %cst_16 : f32 to vector<2x1xf32>
      %c0_17 = arith.constant 0 : index
      %c0_18 = arith.constant 0 : index
      %22 = vector.load %arg5[%c0_17, %c0_18] : memref<2x1xf32, #tpu.memory_space<vmem>>, vector<2x1xf32>
      tpu.vector_store %arg5[%c0_17, %c0_18], %21 {strides = array<i32>} : memref<2x1xf32, #tpu.memory_space<vmem>>, vector<2x1xf32>,
    } else {
    }
    %c0 = arith.constant 0 : index
    %c0_1 = arith.constant 0 : index
    %3 = vector.load %arg2[%c0, %c0_1] : memref<2x1024xf32, #tpu.memory_space<vmem>>, vector<2x1024xf32>
    %c0_2 = arith.constant 0 : index
    %c0_3 = arith.constant 0 : index
    %4 = vector.load %arg3[%c0_2, %c0_3] : memref<2x1024xf32, #tpu.memory_space<vmem>>, vector<2x1024xf32>
    %c0_4 = arith.constant 0 : index
    %c0_5 = arith.constant 0 : index
    %5 = vector.load %arg4[%c0_4, %c0_5] : memref<2x1xf32, #tpu.memory_space<vmem>>, vector<2x1xf32>
    %6 = arith.mulf %3, %4 : vector<2x1024xf32>
    %cst = arith.constant dense<0.000000e+00> : vector<2xf32>
    %7 = vector.multi_reduction <add>, %6, %cst [1] : vector<2x1024xf32> to vector<2xf32>
    %8 = vector.shape_cast %7 : vector<2xf32> to vector<2x1xf32>
    %9 = arith.addf %5, %8 : vector<2x1xf32>
    %c0_6 = arith.constant 0 : index
    %c0_7 = arith.constant 0 : index
    %10 = vector.load %arg4[%c0_6, %c0_7] : memref<2x1xf32, #tpu.memory_space<vmem>>, vector<2x1xf32>
    tpu.vector_store %arg4[%c0_6, %c0_7], %9 {strides = array<i32>} : memref<2x1xf32, #tpu.memory_space<vmem>>, vector<2x1xf32>,
    %11 = arith.mulf %4, %4 : vector<2x1024xf32>
    %c0_8 = arith.constant 0 : index
    %c0_9 = arith.constant 0 : index
    %12 = vector.load %arg5[%c0_8, %c0_9] : memref<2x1xf32, #tpu.memory_space<vmem>>, vector<2x1xf32>
    %13 = arith.mulf %3, %3 : vector<2x1024xf32>
    %14 = arith.addf %13, %11 : vector<2x1024xf32>
    %cst_10 = arith.constant dense<0.000000e+00> : vector<2xf32>
    %15 = vector.multi_reduction <add>, %14, %cst_10 [1] : vector<2x1024xf32> to vector<2xf32>
    %16 = vector.shape_cast %15 : vector<2xf32> to vector<2x1xf32>
    %17 = arith.addf %12, %16 : vector<2x1xf32>
    %c0_11 = arith.constant 0 : index
    %c0_12 = arith.constant 0 : index
    %18 = vector.load %arg5[%c0_11, %c0_12] : memref<2x1xf32, #tpu.memory_space<vmem>>, vector<2x1xf32>
    tpu.vector_store %arg5[%c0_11, %c0_12], %17 {strides = array<i32>} : memref<2x1xf32, #tpu.memory_space<vmem>>, vector<2x1xf32>,
    return
  }
  func.func @transform_0(%arg0: i32, %arg1: i32) -> (i32, i32) {
    %c0_i32 = arith.constant 0 : i32
    return %arg0, %arg1 : i32, i32
  }
  func.func @transform_1(%arg0: i32, %arg1: i32) -> (i32, i32) {
    %c0_i32 = arith.constant 0 : i32
    return %arg0, %arg1 : i32, i32
  }
  func.func @transform_2(%arg0: i32, %arg1: i32) -> (i32, i32) {
    %c0_i32 = arith.constant 0 : i32
    %c0_i32_0 = arith.constant 0 : i32
    return %arg0, %c0_i32 : i32, i32
  }
  func.func @transform_3(%arg0: i32, %arg1: i32) -> (i32, i32) {
    %c0_i32 = arith.constant 0 : i32
    %c0_i32_0 = arith.constant 0 : i32
    return %arg0, %c0_i32 : i32, i32
  }
}

</mosaic_0001>

<llo_original>
// kernel: tpu_custom_call.1
$region0: #{tpu_custom_call.1}
  #allocation0 [shape = 'u32[]', space=smem, size = 0x4, offset = 0x4, fixed_abs, tag = 'smem constant byte address 0x4 - core index']
  #allocation1 [shape = 'u32[72,128]{1,0:T(1,128)}', space=vmem, size = 0x9000, scoped, tag = 'internal scratch']
  %s0 = inlined_call_operand.hbm [shape: f32[2,1024], index: 0, kind: input, shape index: {}]
  %s1 = inlined_call_operand.hbm [shape: f32[2,1024], index: 1, kind: input, shape index: {}]
  %s2 = inlined_call_operand.vmem [shape: f32[2,1], index: 2, kind: output, shape index: {0}]
  %s3 = inlined_call_operand.vmem [shape: f32[2,1], index: 3, kind: output, shape index: {1}]
  %4 = xla_tuple %s2, %s3
  %s5 = sld [smem:[#allocation0]]
  $region38: #{tpu_custom_call.1} parent=0
    _
  %s7 = ssub.s32 1, %s5
  %s8 = scalar_select 0, %s7, %s5
  $region1: #{tpu_custom_call.1} parent=0
    #allocation2 [shape = 'u8[8192]{0}', space=vmem, size = 0x2000, scoped, tag = 'input window, operand 0, single buffered']
    #allocation3 [shape = 's32[1]{0}', space=sflag, size = 0x4, scoped, tag = 'scoped memory for tpu_custom_call.1']
    #allocation4 [shape = 'u8[8192]{0}', space=vmem, size = 0x2000, scoped, tag = 'input window, operand 1, single buffered']
    #allocation5 [shape = 's32[1]{0}', space=sflag, size = 0x4, scoped, tag = 'scoped memory for tpu_custom_call.1']
    %9 = vsyncpa [#allocation3], 0
    %10 = vsyncpa [#allocation5], 0
    // Predicated region
    $region2: #{tpu_custom_call.1} parent=1 // pred_check
      _
    $region3: #{tpu_custom_call.1} parent=1 // pred_check_branch
      %12 = sbr.rel (0) target = $region5
    $region4: #{tpu_custom_call.1} parent=1 // pred_region
      %14 = vsyncadd [#allocation3], 0
      %s16 = sshll.u32 %s0, 4
      %s17 = int_to_ptr.hbm [resolvable:$true] %s16
      %s18 = sshll.u32 [#allocation2], 4
      %s19 = int_to_ptr.vmem [resolvable:$true] %s18
      %21 = dma.hbm_to_vmem [thread:$0]  %s17, 256, %s19, [#allocation3]
    $region5: #{tpu_custom_call.1} parent=1 // pred_fallthru
      _
    // Predicated region
    $region6: #{tpu_custom_call.1} parent=1 // pred_check
      _
    $region7: #{tpu_custom_call.1} parent=1 // pred_check_branch
      %23 = sbr.rel (0) target = $region9
    $region8: #{tpu_custom_call.1} parent=1 // pred_region
      %25 = vsyncadd [#allocation5], 0
      %s27 = sshll.u32 %s1, 4
      %s28 = int_to_ptr.hbm [resolvable:$true] %s27
      %s29 = sshll.u32 [#allocation4], 4
      %s30 = int_to_ptr.vmem [resolvable:$true] %s29
      %32 = dma.hbm_to_vmem [thread:$0]  %s28, 256, %s30, [#allocation5]
    $region9: #{tpu_custom_call.1} parent=1 // pred_fallthru
      _
    // Predicated region
    $region10: #{tpu_custom_call.1} parent=1 // pred_check
      _
    $region11: #{tpu_custom_call.1} parent=1 // pred_check_branch
      %34 = sbr.rel (0) target = $region13
    $region12: #{tpu_custom_call.1} parent=1 // pred_region
      %36 = dma.done [#allocation3], 256
    $region13: #{tpu_custom_call.1} parent=1 // pred_fallthru
      _
    // Predicated region
    $region14: #{tpu_custom_call.1} parent=1 // pred_check
      _
    $region15: #{tpu_custom_call.1} parent=1 // pred_check_branch
      %38 = sbr.rel (0) target = $region17
    $region16: #{tpu_custom_call.1} parent=1 // pred_region
      %40 = dma.done [#allocation5], 256
    $region17: #{tpu_custom_call.1} parent=1 // pred_fallthru
      _
    %p41 = scmp.eq.s32.totalorder 0, 0
    // Predicated region
    $region18: #{tpu_custom_call.1} parent=1 // pred_check
      %p42 = pneg %p41
    $region19: #{tpu_custom_call.1} parent=1 // pred_check_branch
      %44 = sbr.rel (%p42) target = $region21
    $region20: #{tpu_custom_call.1} parent=1 // pred_region
      %vm45 = vcmask 1024
      %46 = vst.msk [vmem:[%s2] sm:$0x3] %vm45, 0.0
      %47 = vst.msk [vmem:[%s3] sm:$0x3] %vm45, 0.0
    $region21: #{tpu_custom_call.1} parent=1 // pred_fallthru
      _
    %v48 = vld [vmem:[#allocation2] sm:$0xff]
    %v49 = vld [vmem:[#allocation2 + $0x8] sm:$0xff]
    %v50 = vld [vmem:[#allocation4] sm:$0xff]
    %v51 = vld [vmem:[#allocation4 + $0x8] sm:$0xff]
    %v52 = vld [vmem:[%s2] sm:$0x3]
    %v53 = vmul.f32 %v48, %v50
    %v54 = vmul.f32 %v49, %v51
    %57 = vst [vmem:[#allocation1] ss:$4 sm:$0xff] %v53
    %s58 = scalar_lea.vmem [#allocation1], 32
    %59 = vst [vmem:[%s58] ss:$4 sm:$0xff] %v54
    %v60 = vld.sshfl [vmem:[#allocation1] sm:$0xff pattern:$0x73625140]
    %v61 = vld.sshfl [vmem:[#allocation1 + $0x8] sm:$0xff pattern:$0x73625140]
    %v62 = vld.sshfl [vmem:[#allocation1 + $0x10] sm:$0xff pattern:$0x73625140]
    %v63 = vld.sshfl [vmem:[#allocation1 + $0x18] sm:$0xff pattern:$0x73625140]
    %v64 = vld.sshfl [vmem:[#allocation1 + $0x20] sm:$0xff pattern:$0x73625140]
    %v65 = vld.sshfl [vmem:[#allocation1 + $0x28] sm:$0xff pattern:$0x73625140]
    %v66 = vld.sshfl [vmem:[#allocation1 + $0x30] sm:$0xff pattern:$0x73625140]
    %v67 = vld.sshfl [vmem:[#allocation1 + $0x38] sm:$0xff pattern:$0x73625140]
    %vm76 = vcmask 1041408
    %v77 = vsel %vm76, %v60, 0.0
    %v78 = vsel %vm76, %v61, 0.0
    %v79 = vadd.f32 %v77, %v78
    %v80 = vsel %vm76, %v62, 0.0
    %v81 = vadd.f32 %v79, %v80
    %v82 = vsel %vm76, %v63, 0.0
    %v83 = vadd.f32 %v81, %v82
    %v84 = vsel %vm76, %v64, 0.0
    %v85 = vadd.f32 %v83, %v84
    %v86 = vsel %vm76, %v65, 0.0
    %v87 = vadd.f32 %v85, %v86
    %v88 = vsel %vm76, %v66, 0.0
    %v89 = vadd.f32 %v87, %v88
    %v90 = vsel %vm76, %v67, 0.0
    %v91 = vadd.f32 %v89, %v90
    %92 = vadd.xlane.f32.xlu0 %v91
    %v93 = vpop.xlane.xlu0 %92
    %v94 = vadd.f32 %v52, %v93
    %vm95 = vcmask 1024
    %96 = vst.msk [vmem:[%s2] sm:$0x3] %vm95, %v94
    %v97 = vmul.f32 %v50, %v50
    %v98 = vmul.f32 %v51, %v51
    %v99 = vld [vmem:[%s3] sm:$0x3]
    %v100 = vmul.f32 %v48, %v48
    %v101 = vmul.f32 %v49, %v49
    %v102 = vadd.f32 %v100, %v97
    %v103 = vadd.f32 %v101, %v98
    %106 = vst [vmem:[#allocation1] ss:$4 sm:$0xff] %v102
    %s107 = scalar_lea.vmem [#allocation1], 32
    %108 = vst [vmem:[%s107] ss:$4 sm:$0xff] %v103
    %v109 = vld.sshfl [vmem:[#allocation1] sm:$0xff pattern:$0x73625140]
    %v110 = vld.sshfl [vmem:[#allocation1 + $0x8] sm:$0xff pattern:$0x73625140]
    %v111 = vld.sshfl [vmem:[#allocation1 + $0x10] sm:$0xff pattern:$0x73625140]
    %v112 = vld.sshfl [vmem:[#allocation1 + $0x18] sm:$0xff pattern:$0x73625140]
    %v113 = vld.sshfl [vmem:[#allocation1 + $0x20] sm:$0xff pattern:$0x73625140]
    %v114 = vld.sshfl [vmem:[#allocation1 + $0x28] sm:$0xff pattern:$0x73625140]
    %v115 = vld.sshfl [vmem:[#allocation1 + $0x30] sm:$0xff pattern:$0x73625140]
    %v116 = vld.sshfl [vmem:[#allocation1 + $0x38] sm:$0xff pattern:$0x73625140]
    %v125 = vsel %vm76, %v109, 0.0
    %v126 = vsel %vm76, %v110, 0.0
    %v127 = vadd.f32 %v125, %v126
    %v128 = vsel %vm76, %v111, 0.0
    %v129 = vadd.f32 %v127, %v128
    %v130 = vsel %vm76, %v112, 0.0
    %v131 = vadd.f32 %v129, %v130
    %v132 = vsel %vm76, %v113, 0.0
    %v133 = vadd.f32 %v131, %v132
    %v134 = vsel %vm76, %v114, 0.0
    %v135 = vadd.f32 %v133, %v134
    %v136 = vsel %vm76, %v115, 0.0
    %v137 = vadd.f32 %v135, %v136
    %v138 = vsel %vm76, %v116, 0.0
    %v139 = vadd.f32 %v137, %v138
    %140 = vadd.xlane.f32.xlu0 %v139
    %v141 = vpop.xlane.xlu0 %140
    %v142 = vadd.f32 %v99, %v141
    %143 = vst.msk [vmem:[%s3] sm:$0x3] %vm95, %v142
    // Predicated region
    $region22: #{tpu_custom_call.1} parent=1 // pred_check
      _
    $region23: #{tpu_custom_call.1} parent=1 // pred_check_branch
      %145 = sbr.rel (0) target = $region25
    $region24: #{tpu_custom_call.1} parent=1 // pred_region
      _
    $region25: #{tpu_custom_call.1} parent=1 // pred_fallthru
      _
    // Predicated region
    $region26: #{tpu_custom_call.1} parent=1 // pred_check
      _
    $region27: #{tpu_custom_call.1} parent=1 // pred_check_branch
      %147 = sbr.rel (0) target = $region29
    $region28: #{tpu_custom_call.1} parent=1 // pred_region
      _
    $region29: #{tpu_custom_call.1} parent=1 // pred_fallthru
      _
    // Predicated region
    $region30: #{tpu_custom_call.1} parent=1 // pred_check
      _
    $region31: #{tpu_custom_call.1} parent=1 // pred_check_branch
      %149 = sbr.rel (0) target = $region33
    $region32: #{tpu_custom_call.1} parent=1 // pred_region
      _
    $region33: #{tpu_custom_call.1} parent=1 // pred_fallthru
      _
    // Predicated region
    $region34: #{tpu_custom_call.1} parent=1 // pred_check
      _
    $region35: #{tpu_custom_call.1} parent=1 // pred_check_branch
      %151 = sbr.rel (0) target = $region37
    $region36: #{tpu_custom_call.1} parent=1 // pred_region
      _
    $region37: #{tpu_custom_call.1} parent=1 // pred_fallthru
      _
    %152 = vsyncpa [#allocation3], 1
    %153 = vsyncpa [#allocation5], 1

</llo_original>
